<compile_context>
chip_gen: v7x
topology: tpu7x:2x2x1
jax: 0.10.0
libtpu: 0.0.40
codegen_flags: <defaults>
</compile_context>

<pallas_src>
import numpy as np
import jax
import jax.numpy as jnp
from jax import lax
from jax.experimental import pallas as pl
from jax.experimental.pallas import tpu as pltpu


def _round_up(x: int, m: int) -> int:
    return ((x + m - 1) // m) * m


def _round_down(x: int, m: int) -> int:
    return (x // m) * m


def _sublane_tile(itemsize: int) -> int:
    # f32 -> 8, bf16/fp16 -> 16, int8/fp8 -> 32 rows per vreg sublane tile.
    return {4: 8, 2: 16, 1: 32}.get(itemsize, 8)


def _device_tuning():
    """Returns (target_block_bytes, vmem_limit_bytes) for the local TPU gen."""
    kind = ""
    try:
        kind = jax.devices()[0].device_kind.lower()
    except Exception:
        pass
    if "v5 lite" in kind or "v5e" in kind or "v5litepod" in kind:
        # v5e: modest blocks; raise scoped VMEM above the 16 MiB default.
        return 2 * 1024 * 1024, 32 * 1024 * 1024
    # v6e / v7x (and default): bigger blocks hide the ~0.35us/step overhead.
    # 40 MiB scoped VMEM is safe on every generation (v7x physical = 64 MiB/TC).
    return 4 * 1024 * 1024, 40 * 1024 * 1024


def _make_normalize_kernel(p: float, eps: float, axis: int, native_dtype_mul: bool):
    def kernel(x_ref, o_ref):
        x = x_ref[...]
        xf = x.astype(jnp.float32)  # accumulate in f32 for stability
        if p == 2.0:
            # max(sqrt(s), eps) == sqrt(max(s, eps^2)); rsqrt runs on the EUP
            # and only once per reduced column.
            ssq = jnp.sum(xf * xf, axis=axis, keepdims=True)
            inv = lax.rsqrt(jnp.maximum(ssq, eps * eps))
        else:
            if p == 1.0:
                nrm = jnp.sum(jnp.abs(xf), axis=axis, keepdims=True)
            elif p == float("inf"):
                nrm = jnp.max(jnp.abs(xf), axis=axis, keepdims=True)
            elif p == float("-inf"):
                nrm = jnp.min(jnp.abs(xf), axis=axis, keepdims=True)
            else:
                nrm = jnp.sum(jnp.abs(xf) ** p, axis=axis, keepdims=True) ** (1.0 / p)
            # Exact reciprocal, but only on the reduced (n/D) tensor.
            inv = 1.0 / jnp.maximum(nrm, eps)
        if native_dtype_mul:
            # bf16/fp16/int8 inputs: scale in native dtype (no full f32 copy).
            o_ref[...] = x * inv.astype(o_ref.dtype)
        else:
            o_ref[...] = (xf * inv).astype(o_ref.dtype)
    return kernel


def _pick_blocks_3d(A: int, D: int, B: int, itemsize: int, target: int):
    """Pick (ta, tb) for a (ta, D, tb) block using the padded VMEM footprint."""
    sub = _sublane_tile(itemsize)
    eff = itemsize + (4 if itemsize < 4 else 0)  # + f32 reduce temp for packed dtypes
    d_pad = _round_up(D, sub)                    # D sits on sublanes
    b_pad_full = _round_up(B, 128)               # B sits on lanes
    row_bytes = d_pad * b_pad_full * eff         # one A-row, full B
    if row_bytes <= target:
        ta = max(1, min(A, target // row_bytes))
        tb = B
    else:
        # Single A-row too big: tile B in multiples of 128 (edge block masked).
        ta = 1
        cap_lanes = max(128, _round_down(target // (d_pad * eff), 128))
        tb = min(b_pad_full, cap_lanes)
        if tb >= B:
            tb = B
    return ta, tb


def _pick_block_rows_2d(A: int, D: int, itemsize: int, target: int) -> int:
    """Pick ta for a (ta, D) block; ta is a sublane-tile multiple or == A."""
    sub = _sublane_tile(itemsize)
    eff = itemsize + (4 if itemsize < 4 else 0)
    d_pad = _round_up(D, 128)                    # D sits on lanes
    cap = max(1, target // (d_pad * eff))
    if cap >= A:
        return A
    ta = max(sub, _round_down(cap, sub))
    return min(ta, A)


def normalize_pallas(x, p: float = 2.0, dim: int = 1, eps: float = 1e-12):
    """Pallas equivalent of torch.nn.functional.normalize(x, p, dim, eps)."""
    p = float(p)
    eps = float(eps)
    ndim = x.ndim
    dim = dim % ndim
    D = x.shape[dim]
    A = int(np.prod(x.shape[:dim], dtype=np.int64)) if dim > 0 else 1
    B = int(np.prod(x.shape[dim + 1:], dtype=np.int64)) if dim < ndim - 1 else 1
    itemsize = x.dtype.itemsize

    target, vmem_limit = _device_tuning()
    native_mul = x.dtype != jnp.float32

    n_elems = A * D * B
    cost = pl.CostEstimate(
        flops=3 * n_elems,                      # mul + reduce-add + scale (approx)
        transcendentals=A * B,                  # one rsqrt/reciprocal per column
        bytes_accessed=2 * n_elems * itemsize,  # read x once, write out once
    )

    if B == 1:
        # `dim` is effectively the last axis: put D on the lane axis so the
        # reduction runs along lanes and stores stay lane-dense.
        x2 = x.reshape(A, D)
        ta = _pick_block_rows_2d(A, D, itemsize, target)
        out2 = pl.pallas_call(
            _make_normalize_kernel(p, eps, axis=1, native_dtype_mul=native_mul),
            out_shape=jax.ShapeDtypeStruct((A, D), x.dtype),
            grid=(pl.cdiv(A, ta),),
            in_specs=[pl.BlockSpec((ta, D), lambda a: (a, 0))],
            out_specs=pl.BlockSpec((ta, D), lambda a: (a, 0)),
            compiler_params=pltpu.CompilerParams(
                dimension_semantics=("parallel",),
                vmem_limit_bytes=vmem_limit),
            cost_estimate=cost,
        )(x2)
        return out2.reshape(x.shape)

    x3 = x.reshape(A, D, B)
    ta, tb = _pick_blocks_3d(A, D, B, itemsize, target)
    out3 = pl.pallas_call(
        _make_normalize_kernel(p, eps, axis=1, native_dtype_mul=native_mul),
        out_shape=jax.ShapeDtypeStruct((A, D, B), x.dtype),
        grid=(pl.cdiv(A, ta), pl.cdiv(B, tb)),
        in_specs=[pl.BlockSpec((ta, D, tb), lambda a, b: (a, 0, b))],
        out_specs=pl.BlockSpec((ta, D, tb), lambda a, b: (a, 0, b)),
        compiler_params=pltpu.CompilerParams(
            dimension_semantics=("parallel", "parallel"),
            vmem_limit_bytes=vmem_limit),
        cost_estimate=cost,
    )(x3)
    return out3.reshape(x.shape)


class Normalize:
    """Pallas-backed module mirroring torchwrench's Normalize (F.normalize)."""

    def __init__(self, p: float = 2.0, dim: int = 1, eps: float = 1e-12):
        self.p = p
        self.dim = dim
        self.eps = eps

    def __call__(self, x):
        return normalize_pallas(x, self.p, self.dim, self.eps)


def _reference_normalize(x, p, dim, eps):
    xf = x.astype(jnp.float32)
    if p == 2.0:
        nrm = jnp.sqrt(jnp.sum(xf * xf, axis=dim, keepdims=True))
    elif p == 1.0:
        nrm = jnp.sum(jnp.abs(xf), axis=dim, keepdims=True)
    else:
        nrm = jnp.sum(jnp.abs(xf) ** p, axis=dim, keepdims=True) ** (1.0 / p)
    return (xf / jnp.maximum(nrm, eps)).astype(x.dtype)


if __name__ == "__main__":
    key = jax.random.PRNGKey(0)
    # NCHW-style small input, normalize over channels (the default dim=1).
    x = jax.random.normal(key, (2, 4, 16, 16), dtype=jnp.float32)

    mod = Normalize(p=2.0, dim=1, eps=1e-12)
    out = jax.block_until_ready(mod(x))
    ref = _reference_normalize(x, 2.0, 1, 1e-12)
    np.testing.assert_allclose(np.asarray(out), np.asarray(ref), rtol=1e-5, atol=1e-6)
    assert out.shape == x.shape

    # dim == last-axis (lane-reduction, 2-D) path.
    mod_last = Normalize(p=2.0, dim=-1, eps=1e-12)
    out_last = jax.block_until_ready(mod_last(x))
    ref_last = _reference_normalize(x, 2.0, -1, 1e-12)
    np.testing.assert_allclose(np.asarray(out_last), np.asarray(ref_last),
                               rtol=1e-5, atol=1e-6)

    # p=1 path (exercises the reduced-tensor reciprocal branch).
    mod_l1 = Normalize(p=1.0, dim=1, eps=1e-12)
    out_l1 = jax.block_until_ready(mod_l1(x))
    ref_l1 = _reference_normalize(x, 1.0, 1, 1e-12)
    np.testing.assert_allclose(np.asarray(out_l1), np.asarray(ref_l1),
                               rtol=1e-5, atol=1e-6)

    print("KERNEL_OK")
</pallas_src>

<mosaic_0001>
module attributes {stable_mosaic.version = 11 : i64} {
  func.func @kernel(%arg0: i32, %arg1: i32, %arg2: memref<2x4x256xf32, #tpu.memory_space<vmem>>, %arg3: memref<2x4x256xf32, #tpu.memory_space<vmem>>) attributes {dimension_semantics = [#tpu.dimension_semantics<parallel>, #tpu.dimension_semantics<parallel>], iteration_bounds = array<i64: 1, 1>, scalar_prefetch = 0 : i64, scratch_operands = 0 : i64, tpu.core_type = #tpu.core_type<tc>, window_params = [{transform_indices = @transform_0, window_bounds = array<i64: 2, 4, 256>}, {transform_indices = @transform_1, window_bounds = array<i64: 2, 4, 256>}]} {
    %c0 = arith.constant 0 : index
    %c0_0 = arith.constant 0 : index
    %c0_1 = arith.constant 0 : index
    %0 = vector.load %arg2[%c0, %c0_0, %c0_1] : memref<2x4x256xf32, #tpu.memory_space<vmem>>, vector<2x4x256xf32>
    %1 = arith.mulf %0, %0 : vector<2x4x256xf32>
    %cst = arith.constant dense<0.000000e+00> : vector<2x256xf32>
    %2 = vector.multi_reduction <add>, %1, %cst [1] : vector<2x4x256xf32> to vector<2x256xf32>
    %3 = vector.shape_cast %2 : vector<2x256xf32> to vector<2x1x256xf32>
    %cst_2 = arith.constant 1.000000e-24 : f32
    %4 = vector.broadcast %cst_2 : f32 to vector<2x1x256xf32>
    %5 = arith.maximumf %3, %4 : vector<2x1x256xf32>
    %6 = math.rsqrt %5 : vector<2x1x256xf32>
    %7 = vector.broadcast %6 : vector<2x1x256xf32> to vector<2x4x256xf32>
    %8 = arith.mulf %0, %7 : vector<2x4x256xf32>
    %c0_3 = arith.constant 0 : index
    %c0_4 = arith.constant 0 : index
    %c0_5 = arith.constant 0 : index
    %9 = vector.load %arg3[%c0_3, %c0_4, %c0_5] : memref<2x4x256xf32, #tpu.memory_space<vmem>>, vector<2x4x256xf32>
    tpu.vector_store %arg3[%c0_3, %c0_4, %c0_5], %8 {strides = array<i32>} : memref<2x4x256xf32, #tpu.memory_space<vmem>>, vector<2x4x256xf32>,
    return
  }
  func.func @transform_0(%arg0: i32, %arg1: i32) -> (i32, i32, i32) {
    %c0_i32 = arith.constant 0 : i32
    %c0_i32_0 = arith.constant 0 : i32
    return %arg0, %c0_i32, %arg1 : i32, i32, i32
  }
  func.func @transform_1(%arg0: i32, %arg1: i32) -> (i32, i32, i32) {
    %c0_i32 = arith.constant 0 : i32
    %c0_i32_0 = arith.constant 0 : i32
    return %arg0, %c0_i32, %arg1 : i32, i32, i32
  }
}

</mosaic_0001>

<llo_original>
// kernel: tpu_custom_call.1
$region0: #{tpu_custom_call.1}
  #allocation0 [shape = 'u32[]', space=smem, size = 0x4, offset = 0x4, fixed_abs, tag = 'smem constant byte address 0x4 - core index']
  #allocation1 [shape = 'u32[144,128]{1,0:T(1,128)}', space=vmem, size = 0x12000, scoped, tag = 'internal scratch']
  %s0 = inlined_call_operand.hbm [shape: f32[2,4,256], index: 0, kind: input, shape index: {}]
  %s1 = inlined_call_operand.hbm [shape: f32[2,4,256], index: 1, kind: output, shape index: {}]
  %s2 = sld [smem:[#allocation0]]
  $region18: #{tpu_custom_call.1} parent=0
    _
  %s4 = ssub.s32 1, %s2
  %s5 = scalar_select 0, %s4, %s2
  $region1: #{tpu_custom_call.1} parent=0
    #allocation2 [shape = 'u8[8192]{0}', space=vmem, size = 0x2000, scoped, tag = 'input window, operand 0, single buffered']
    #allocation3 [shape = 's32[1]{0}', space=sflag, size = 0x4, scoped, tag = 'scoped memory for tpu_custom_call.1']
    #allocation4 [shape = 's32[1]{0}', space=sflag, size = 0x4, scoped, tag = 'scoped memory for tpu_custom_call.1']
    #allocation5 [shape = 'u8[8192]{0}', space=vmem, size = 0x2000, scoped, tag = 'output window, operand 0, single buffered']
    %6 = vsyncpa [#allocation3], 0
    %7 = vsyncpa [#allocation4], 0
    // Predicated region
    $region2: #{tpu_custom_call.1} parent=1 // pred_check
      _
    $region3: #{tpu_custom_call.1} parent=1 // pred_check_branch
      %9 = sbr.rel (0) target = $region5
    $region4: #{tpu_custom_call.1} parent=1 // pred_region
      %s11 = ssub.s32 256, 256
      %12 = vsyncadd [#allocation3], %s11
      %s13 = sshll.u32 [#allocation2], 4
      %s14 = int_to_ptr.vmem [resolvable:$true] %s13
      %19 = dma.hbm_to_vmem [thread:$0]  %s0, 256, %s14, [#allocation3], 128, 128, 8
    $region5: #{tpu_custom_call.1} parent=1 // pred_fallthru
      _
    // Predicated region
    $region6: #{tpu_custom_call.1} parent=1 // pred_check
      _
    $region7: #{tpu_custom_call.1} parent=1 // pred_check_branch
      %21 = sbr.rel (0) target = $region9
    $region8: #{tpu_custom_call.1} parent=1 // pred_region
      %22 = dma.done [#allocation3], 256
    $region9: #{tpu_custom_call.1} parent=1 // pred_fallthru
      _
    %v23 = vld [vmem:[#allocation2] sm:$0xff]
    %v24 = vld [vmem:[#allocation2 + $0x8] sm:$0xff]
    %v25 = vmul.f32 %v23, %v23
    %v26 = vmul.f32 %v24, %v24
    %v29 = vcombine.high %v25, %v25
    %v30 = vcombine.high %v26, %v26
    %vm33 = vcmask 1043456
    %v34 = vsel %vm33, %v25, 0.0
    %v35 = vrot.slane %v34, 4
    %v36 = vadd.f32 %v34, %v35
    %v37 = vrot.slane %v36, 2
    %v38 = vadd.f32 %v36, %v37
    %v39 = vrot.slane %v38, 1
    %v40 = vadd.f32 %v38, %v39
    %v41 = vsel %vm33, %v29, 0.0
    %v42 = vrot.slane %v41, 4
    %v43 = vadd.f32 %v41, %v42
    %v44 = vrot.slane %v43, 2
    %v45 = vadd.f32 %v43, %v44
    %v46 = vrot.slane %v45, 1
    %v47 = vadd.f32 %v45, %v46
    %v48 = vsel %vm33, %v26, 0.0
    %v49 = vrot.slane %v48, 4
    %v50 = vadd.f32 %v48, %v49
    %v51 = vrot.slane %v50, 2
    %v52 = vadd.f32 %v50, %v51
    %v53 = vrot.slane %v52, 1
    %v54 = vadd.f32 %v52, %v53
    %v55 = vsel %vm33, %v30, 0.0
    %v56 = vrot.slane %v55, 4
    %v57 = vadd.f32 %v55, %v56
    %v58 = vrot.slane %v57, 2
    %v59 = vadd.f32 %v57, %v58
    %v60 = vrot.slane %v59, 1
    %v61 = vadd.f32 %v59, %v60
    %v62 = vmax.f32 %v40, 1e-24
    %v63 = vmax.f32 %v47, 1e-24
    %v64 = vmax.f32 %v54, 1e-24
    %v65 = vmax.f32 %v61, 1e-24
    %v66 = vrsqrt.pop %v62
    %v67 = vrsqrt.pop %v63
    %v68 = vrsqrt.pop %v64
    %v69 = vrsqrt.pop %v65
    %v74 = vcombine.low %v66, %v67
    %v75 = vcombine.low %v68, %v69
    %v78 = vmul.f32 %v23, %v74
    %v79 = vmul.f32 %v24, %v75
    %80 = vst [vmem:[#allocation5] sm:$0xff] %v78
    %81 = vst [vmem:[#allocation5 + $0x8] sm:$0xff] %v79
    // Predicated region
    $region10: #{tpu_custom_call.1} parent=1 // pred_check
      _
    $region11: #{tpu_custom_call.1} parent=1 // pred_check_branch
      %83 = sbr.rel (0) target = $region13
    $region12: #{tpu_custom_call.1} parent=1 // pred_region
      %s85 = ssub.s32 256, 256
      %86 = vsyncadd [#allocation4], %s85
      %s87 = sshll.u32 [#allocation5], 4
      %s88 = int_to_ptr.vmem [resolvable:$true] %s87
      %93 = dma.vmem_to_hbm [thread:$0]  %s88, 256, %s1, [#allocation4], 128, 128, 8
    $region13: #{tpu_custom_call.1} parent=1 // pred_fallthru
      _
    // Predicated region
    $region14: #{tpu_custom_call.1} parent=1 // pred_check
      _
    $region15: #{tpu_custom_call.1} parent=1 // pred_check_branch
      %95 = sbr.rel (0) target = $region17
    $region16: #{tpu_custom_call.1} parent=1 // pred_region
      %96 = dma.done [#allocation4], 256
    $region17: #{tpu_custom_call.1} parent=1 // pred_fallthru
      _
    %97 = vsyncpa [#allocation3], 1
    %98 = vsyncpa [#allocation4], 1

</llo_original>
